<compile_context>
chip_gen: v7x
topology: tpu7x:2x2x1
jax: 0.10.0
libtpu: 0.0.40
codegen_flags: <defaults>
</compile_context>

<pallas_src>
import functools

import jax
import jax.numpy as jnp
from jax.experimental import pallas as pl
from jax.experimental.pallas import tpu as pltpu

NLAYER = 6
LEAKY_SLOPE = 0.01


def _round_up(x, m):
    return (x + m - 1) // m * m


def _cdiv(a, b):
    return -(-a // b)


def _choose_cp(c):
    """Pad the channel dim to a 128 multiple only if the overhead is small."""
    if c % 128 == 0:
        return c
    cp = _round_up(c, 128)
    return cp if (cp - c) * 8 <= c else c  # <= ~12.5% row overhead


def _choose_batch_tile(b, cp):
    """Pick (tile_rows, padded_batch, n_tiles) so each grid step moves ~>=2MiB."""
    target_rows = max(256, (2 << 20) // (8 * cp))   # in(f32)+out(f32) ~ 8B/row/lane
    tile_cap = min(2048, _round_up(target_rows, 8))
    if b <= tile_cap:
        return b, b, 1                               # single full-batch block, no pad
    n = _cdiv(b, tile_cap)
    tb = _round_up(_cdiv(b, n), 8)                   # balanced tiles, <8 rows waste/tile
    return tb, n * tb, n


def _embed_mlp_kernel(x_ref, w_ref, b_ref, o_ref, *, num_layers):
    # x_ref: (TB, Cp) f32   (cast to bf16 in-register at each matmul input)
    # w_ref: (L, Cp, Cp) bf16, (in, out) layout -> plain NN matmul on the MXU
    # b_ref: (L, 1, Cp) f32
    # o_ref: (TB, Cp) f32
    h = x_ref[...].astype(jnp.float32)
    for l in range(num_layers):  # static unroll: small, fixed depth
        y = jnp.dot(h.astype(jnp.bfloat16), w_ref[l],
                    preferred_element_type=jnp.float32)
        y = y + b_ref[l]
        h = jnp.maximum(y, LEAKY_SLOPE * y)  # LeakyReLU(0.01), slope in (0,1)
    o_ref[...] = h.astype(o_ref.dtype)


def prepare_params(weights, biases):
    """One-time prep: weights (L, C, C) PyTorch (out,in) -> padded bf16 (L, Cp_in, Cp_out);
    biases (L, C) -> padded f32 (L, 1, Cp).  Do NOT call per step."""
    num_layers, c_out, c_in = weights.shape
    assert c_out == c_in
    cp = _choose_cp(c_in)
    w_t = jnp.swapaxes(weights, 1, 2)                              # (L, in, out)
    w_p = jnp.pad(w_t, ((0, 0), (0, cp - c_in), (0, cp - c_out))).astype(jnp.bfloat16)
    b_p = jnp.pad(biases, ((0, 0), (0, cp - c_out))).reshape(
        num_layers, 1, cp).astype(jnp.float32)
    return w_p, b_p


@jax.jit
def old_embed_block(x_nchw, w_prep, b_prep):
    """x_nchw: (B, C, 1, 1); w_prep/b_prep from prepare_params.
    Returns (B, C, 1, 1) float32."""
    b, c, h, w = x_nchw.shape
    assert h == 1 and w == 1, "OldEmbedBlock.forward requires spatial dims == 1"
    num_layers, cp, _ = w_prep.shape
    assert cp >= c

    tb, bp, n_tiles = _choose_batch_tile(b, cp)

    x2d = x_nchw.reshape(b, c).astype(jnp.float32)
    padded = (bp > b) or (cp > c)
    if padded:
        x2d = jnp.pad(x2d, ((0, bp - b), (0, cp - c)))

    flops = 2 * bp * cp * cp * num_layers
    bytes_accessed = (bp * cp * 4                      # activations in (f32)
                      + w_prep.size * 2                # weights (bf16)
                      + b_prep.size * 4                # biases (f32)
                      + bp * cp * 4)                   # output (f32)
    cost = pl.CostEstimate(flops=flops, transcendentals=0,
                           bytes_accessed=bytes_accessed)

    # VMEM budget: double-buffered activation/out tiles + resident weight/bias
    # blocks (Pallas still allocates 2 buffers for constant-index blocks).
    block_bytes = (2 * tb * cp * 4                     # x tile (f32), double-buffered
                   + 2 * tb * cp * 4                   # out tile (f32), double-buffered
                   + 2 * num_layers * cp * cp * 2      # weights (bf16)
                   + 2 * num_layers * cp * 4)          # biases (f32)
    vmem_limit = int(min(40 * 2**20, max(16 * 2**20, 2 * block_bytes)))

    out2d = pl.pallas_call(
        functools.partial(_embed_mlp_kernel, num_layers=num_layers),
        out_shape=jax.ShapeDtypeStruct((bp, cp), jnp.float32),
        grid=(n_tiles,),
        in_specs=[
            pl.BlockSpec((tb, cp), lambda i: (i, 0)),                  # activations: tiled
            pl.BlockSpec((num_layers, cp, cp), lambda i: (0, 0, 0)),   # weights: resident
            pl.BlockSpec((num_layers, 1, cp), lambda i: (0, 0, 0)),    # biases: resident
        ],
        out_specs=pl.BlockSpec((tb, cp), lambda i: (i, 0)),
        compiler_params=pltpu.CompilerParams(
            dimension_semantics=("parallel",),
            vmem_limit_bytes=vmem_limit,
        ),
        cost_estimate=cost,
    )(x2d, w_prep, b_prep)

    if padded:
        out2d = out2d[:b, :c]
    return out2d.reshape(b, c, 1, 1)


def init_params(key, c, num_layers=NLAYER):
    """PyTorch nn.Linear default init: U(-1/sqrt(in), 1/sqrt(in)); (out, in) layout."""
    bound = 1.0 / (c ** 0.5)
    keys = jax.random.split(key, 2 * num_layers)
    ws = jnp.stack(
        [jax.random.uniform(keys[2 * i], (c, c), jnp.float32, -bound, bound)
         for i in range(num_layers)]
    )
    bs = jnp.stack(
        [jax.random.uniform(keys[2 * i + 1], (c,), jnp.float32, -bound, bound)
         for i in range(num_layers)]
    )
    return ws, bs


if __name__ == "__main__":
    key = jax.random.PRNGKey(0)
    k_x, k_p = jax.random.split(key)

    B, C = 2, 32  # batch=2, input_channel=32, num_cls=0, spatial 1x1
    x = jax.random.normal(k_x, (B, C, 1, 1), jnp.float32)
    weights, biases = init_params(k_p, C)

    # One-time parameter prep (outside the per-call path).
    w_prep, b_prep = prepare_params(weights, biases)

    out = old_embed_block(x, w_prep, b_prep)
    out = jax.block_until_ready(out)
    assert out.shape == (B, C, 1, 1)
    assert out.dtype == jnp.float32

    # Reference 1: mirror the kernel's mixed-precision recipe (tight-ish check).
    h_ref = x.reshape(B, C).astype(jnp.float32)
    for l in range(NLAYER):
        y = jnp.dot(h_ref.astype(jnp.bfloat16),
                    weights[l].T.astype(jnp.bfloat16),
                    preferred_element_type=jnp.float32) + biases[l]
        h_ref = jnp.maximum(y, LEAKY_SLOPE * y)
    ref_mixed = h_ref.reshape(B, C, 1, 1)
    assert jnp.allclose(out, ref_mixed, atol=1e-2, rtol=1e-2)

    # Reference 2: pure-f32 PyTorch semantics (loose: bf16 matmul inputs).
    h32 = x.reshape(B, C)
    for l in range(NLAYER):
        h32 = h32 @ weights[l].T + biases[l]
        h32 = jnp.maximum(h32, LEAKY_SLOPE * h32)
    ref_f32 = h32.reshape(B, C, 1, 1)
    assert jnp.allclose(out, ref_f32, atol=5e-2, rtol=5e-2)

    print("KERNEL_OK")
</pallas_src>

<mosaic_0001>
module attributes {stable_mosaic.version = 11 : i64} {
  func.func @_embed_mlp_kernel(%arg0: i32, %arg1: memref<2x32xf32, #tpu.memory_space<vmem>>, %arg2: memref<6x32x32xbf16, #tpu.memory_space<vmem>>, %arg3: memref<6x1x32xf32, #tpu.memory_space<vmem>>, %arg4: memref<2x32xf32, #tpu.memory_space<vmem>>) attributes {dimension_semantics = [#tpu.dimension_semantics<parallel>], iteration_bounds = array<i64: 1>, scalar_prefetch = 0 : i64, scratch_operands = 0 : i64, tpu.core_type = #tpu.core_type<tc>, window_params = [{transform_indices = @transform_0, window_bounds = array<i64: 2, 32>}, {pipeline_mode = #tpu.pipeline_mode<synchronous>, transform_indices = @transform_1, window_bounds = array<i64: 6, 32, 32>}, {pipeline_mode = #tpu.pipeline_mode<synchronous>, transform_indices = @transform_2, window_bounds = array<i64: 6, 1, 32>}, {transform_indices = @transform_3, window_bounds = array<i64: 2, 32>}]} {
    %c0 = arith.constant 0 : index
    %c0_0 = arith.constant 0 : index
    %0 = vector.load %arg1[%c0, %c0_0] : memref<2x32xf32, #tpu.memory_space<vmem>>, vector<2x32xf32>
    %1 = arith.truncf %0 : vector<2x32xf32> to vector<2x32xbf16>
    %c0_1 = arith.constant 0 : index
    %c0_2 = arith.constant 0 : index
    %c0_3 = arith.constant 0 : index
    %2 = vector.load %arg2[%c0_1, %c0_2, %c0_3] : memref<6x32x32xbf16, #tpu.memory_space<vmem>>, vector<1x32x32xbf16>
    %3 = vector.shape_cast %2 : vector<1x32x32xbf16> to vector<32x32xbf16>
    %cst = arith.constant dense<0.000000e+00> : vector<2x32xf32>
    %4 = tpu.matmul %1, %3, %cst {dimension_numbers = #tpu.dot_dimension_numbers<[1], [0], [0], [1], [0, 0, 1, 1], [], []>} : vector<2x32xbf16>, vector<32x32xbf16>, vector<2x32xf32> -> vector<2x32xf32>
    %c0_4 = arith.constant 0 : index
    %c0_5 = arith.constant 0 : index
    %c0_6 = arith.constant 0 : index
    %5 = vector.load %arg3[%c0_4, %c0_5, %c0_6] : memref<6x1x32xf32, #tpu.memory_space<vmem>>, vector<1x1x32xf32>
    %6 = vector.shape_cast %5 : vector<1x1x32xf32> to vector<1x32xf32>
    %7 = vector.broadcast %6 : vector<1x32xf32> to vector<2x32xf32>
    %8 = arith.addf %4, %7 : vector<2x32xf32>
    %cst_7 = arith.constant 0.00999999977 : f32
    %9 = vector.broadcast %cst_7 : f32 to vector<2x32xf32>
    %10 = arith.mulf %9, %8 : vector<2x32xf32>
    %11 = arith.maximumf %8, %10 : vector<2x32xf32>
    %12 = arith.truncf %11 : vector<2x32xf32> to vector<2x32xbf16>
    %c1 = arith.constant 1 : index
    %c0_8 = arith.constant 0 : index
    %c0_9 = arith.constant 0 : index
    %13 = vector.load %arg2[%c1, %c0_8, %c0_9] : memref<6x32x32xbf16, #tpu.memory_space<vmem>>, vector<1x32x32xbf16>
    %14 = vector.shape_cast %13 : vector<1x32x32xbf16> to vector<32x32xbf16>
    %cst_10 = arith.constant dense<0.000000e+00> : vector<2x32xf32>
    %15 = tpu.matmul %12, %14, %cst_10 {dimension_numbers = #tpu.dot_dimension_numbers<[1], [0], [0], [1], [0, 0, 1, 1], [], []>} : vector<2x32xbf16>, vector<32x32xbf16>, vector<2x32xf32> -> vector<2x32xf32>
    %c1_11 = arith.constant 1 : index
    %c0_12 = arith.constant 0 : index
    %c0_13 = arith.constant 0 : index
    %16 = vector.load %arg3[%c1_11, %c0_12, %c0_13] : memref<6x1x32xf32, #tpu.memory_space<vmem>>, vector<1x1x32xf32>
    %17 = vector.shape_cast %16 : vector<1x1x32xf32> to vector<1x32xf32>
    %18 = vector.broadcast %17 : vector<1x32xf32> to vector<2x32xf32>
    %19 = arith.addf %15, %18 : vector<2x32xf32>
    %cst_14 = arith.constant 0.00999999977 : f32
    %20 = vector.broadcast %cst_14 : f32 to vector<2x32xf32>
    %21 = arith.mulf %20, %19 : vector<2x32xf32>
    %22 = arith.maximumf %19, %21 : vector<2x32xf32>
    %23 = arith.truncf %22 : vector<2x32xf32> to vector<2x32xbf16>
    %c2 = arith.constant 2 : index
    %c0_15 = arith.constant 0 : index
    %c0_16 = arith.constant 0 : index
    %24 = vector.load %arg2[%c2, %c0_15, %c0_16] : memref<6x32x32xbf16, #tpu.memory_space<vmem>>, vector<1x32x32xbf16>
    %25 = vector.shape_cast %24 : vector<1x32x32xbf16> to vector<32x32xbf16>
    %cst_17 = arith.constant dense<0.000000e+00> : vector<2x32xf32>
    %26 = tpu.matmul %23, %25, %cst_17 {dimension_numbers = #tpu.dot_dimension_numbers<[1], [0], [0], [1], [0, 0, 1, 1], [], []>} : vector<2x32xbf16>, vector<32x32xbf16>, vector<2x32xf32> -> vector<2x32xf32>
    %c2_18 = arith.constant 2 : index
    %c0_19 = arith.constant 0 : index
    %c0_20 = arith.constant 0 : index
    %27 = vector.load %arg3[%c2_18, %c0_19, %c0_20] : memref<6x1x32xf32, #tpu.memory_space<vmem>>, vector<1x1x32xf32>
    %28 = vector.shape_cast %27 : vector<1x1x32xf32> to vector<1x32xf32>
    %29 = vector.broadcast %28 : vector<1x32xf32> to vector<2x32xf32>
    %30 = arith.addf %26, %29 : vector<2x32xf32>
    %cst_21 = arith.constant 0.00999999977 : f32
    %31 = vector.broadcast %cst_21 : f32 to vector<2x32xf32>
    %32 = arith.mulf %31, %30 : vector<2x32xf32>
    %33 = arith.maximumf %30, %32 : vector<2x32xf32>
    %34 = arith.truncf %33 : vector<2x32xf32> to vector<2x32xbf16>
    %c3 = arith.constant 3 : index
    %c0_22 = arith.constant 0 : index
    %c0_23 = arith.constant 0 : index
    %35 = vector.load %arg2[%c3, %c0_22, %c0_23] : memref<6x32x32xbf16, #tpu.memory_space<vmem>>, vector<1x32x32xbf16>
    %36 = vector.shape_cast %35 : vector<1x32x32xbf16> to vector<32x32xbf16>
    %cst_24 = arith.constant dense<0.000000e+00> : vector<2x32xf32>
    %37 = tpu.matmul %34, %36, %cst_24 {dimension_numbers = #tpu.dot_dimension_numbers<[1], [0], [0], [1], [0, 0, 1, 1], [], []>} : vector<2x32xbf16>, vector<32x32xbf16>, vector<2x32xf32> -> vector<2x32xf32>
    %c3_25 = arith.constant 3 : index
    %c0_26 = arith.constant 0 : index
    %c0_27 = arith.constant 0 : index
    %38 = vector.load %arg3[%c3_25, %c0_26, %c0_27] : memref<6x1x32xf32, #tpu.memory_space<vmem>>, vector<1x1x32xf32>
    %39 = vector.shape_cast %38 : vector<1x1x32xf32> to vector<1x32xf32>
    %40 = vector.broadcast %39 : vector<1x32xf32> to vector<2x32xf32>
    %41 = arith.addf %37, %40 : vector<2x32xf32>
    %cst_28 = arith.constant 0.00999999977 : f32
    %42 = vector.broadcast %cst_28 : f32 to vector<2x32xf32>
    %43 = arith.mulf %42, %41 : vector<2x32xf32>
    %44 = arith.maximumf %41, %43 : vector<2x32xf32>
    %45 = arith.truncf %44 : vector<2x32xf32> to vector<2x32xbf16>
    %c4 = arith.constant 4 : index
    %c0_29 = arith.constant 0 : index
    %c0_30 = arith.constant 0 : index
    %46 = vector.load %arg2[%c4, %c0_29, %c0_30] : memref<6x32x32xbf16, #tpu.memory_space<vmem>>, vector<1x32x32xbf16>
    %47 = vector.shape_cast %46 : vector<1x32x32xbf16> to vector<32x32xbf16>
    %cst_31 = arith.constant dense<0.000000e+00> : vector<2x32xf32>
    %48 = tpu.matmul %45, %47, %cst_31 {dimension_numbers = #tpu.dot_dimension_numbers<[1], [0], [0], [1], [0, 0, 1, 1], [], []>} : vector<2x32xbf16>, vector<32x32xbf16>, vector<2x32xf32> -> vector<2x32xf32>
    %c4_32 = arith.constant 4 : index
    %c0_33 = arith.constant 0 : index
    %c0_34 = arith.constant 0 : index
    %49 = vector.load %arg3[%c4_32, %c0_33, %c0_34] : memref<6x1x32xf32, #tpu.memory_space<vmem>>, vector<1x1x32xf32>
    %50 = vector.shape_cast %49 : vector<1x1x32xf32> to vector<1x32xf32>
    %51 = vector.broadcast %50 : vector<1x32xf32> to vector<2x32xf32>
    %52 = arith.addf %48, %51 : vector<2x32xf32>
    %cst_35 = arith.constant 0.00999999977 : f32
    %53 = vector.broadcast %cst_35 : f32 to vector<2x32xf32>
    %54 = arith.mulf %53, %52 : vector<2x32xf32>
    %55 = arith.maximumf %52, %54 : vector<2x32xf32>
    %56 = arith.truncf %55 : vector<2x32xf32> to vector<2x32xbf16>
    %c5 = arith.constant 5 : index
    %c0_36 = arith.constant 0 : index
    %c0_37 = arith.constant 0 : index
    %57 = vector.load %arg2[%c5, %c0_36, %c0_37] : memref<6x32x32xbf16, #tpu.memory_space<vmem>>, vector<1x32x32xbf16>
    %58 = vector.shape_cast %57 : vector<1x32x32xbf16> to vector<32x32xbf16>
    %cst_38 = arith.constant dense<0.000000e+00> : vector<2x32xf32>
    %59 = tpu.matmul %56, %58, %cst_38 {dimension_numbers = #tpu.dot_dimension_numbers<[1], [0], [0], [1], [0, 0, 1, 1], [], []>} : vector<2x32xbf16>, vector<32x32xbf16>, vector<2x32xf32> -> vector<2x32xf32>
    %c5_39 = arith.constant 5 : index
    %c0_40 = arith.constant 0 : index
    %c0_41 = arith.constant 0 : index
    %60 = vector.load %arg3[%c5_39, %c0_40, %c0_41] : memref<6x1x32xf32, #tpu.memory_space<vmem>>, vector<1x1x32xf32>
    %61 = vector.shape_cast %60 : vector<1x1x32xf32> to vector<1x32xf32>
    %62 = vector.broadcast %61 : vector<1x32xf32> to vector<2x32xf32>
    %63 = arith.addf %59, %62 : vector<2x32xf32>
    %cst_42 = arith.constant 0.00999999977 : f32
    %64 = vector.broadcast %cst_42 : f32 to vector<2x32xf32>
    %65 = arith.mulf %64, %63 : vector<2x32xf32>
    %66 = arith.maximumf %63, %65 : vector<2x32xf32>
    %c0_43 = arith.constant 0 : index
    %c0_44 = arith.constant 0 : index
    %67 = vector.load %arg4[%c0_43, %c0_44] : memref<2x32xf32, #tpu.memory_space<vmem>>, vector<2x32xf32>
    tpu.vector_store %arg4[%c0_43, %c0_44], %66 {strides = array<i32>} : memref<2x32xf32, #tpu.memory_space<vmem>>, vector<2x32xf32>,
    return
  }
  func.func @transform_0(%arg0: i32) -> (i32, i32) {
    %c0_i32 = arith.constant 0 : i32
    %c0_i32_0 = arith.constant 0 : i32
    return %arg0, %c0_i32 : i32, i32
  }
  func.func @transform_1(%arg0: i32) -> (i32, i32, i32) {
    %c0_i32 = arith.constant 0 : i32
    %c0_i32_0 = arith.constant 0 : i32
    %c0_i32_1 = arith.constant 0 : i32
    %c0_i32_2 = arith.constant 0 : i32
    return %c0_i32, %c0_i32_0, %c0_i32_1 : i32, i32, i32
  }
  func.func @transform_2(%arg0: i32) -> (i32, i32, i32) {
    %c0_i32 = arith.constant 0 : i32
    %c0_i32_0 = arith.constant 0 : i32
    %c0_i32_1 = arith.constant 0 : i32
    %c0_i32_2 = arith.constant 0 : i32
    return %c0_i32, %c0_i32_0, %c0_i32_1 : i32, i32, i32
  }
  func.func @transform_3(%arg0: i32) -> (i32, i32) {
    %c0_i32 = arith.constant 0 : i32
    %c0_i32_0 = arith.constant 0 : i32
    return %arg0, %c0_i32 : i32, i32
  }
}

</mosaic_0001>

<llo_original>
// kernel: old_embed_block.1
$region0: #{old_embed_block.1}
  #allocation0 [shape = 'u32[]', space=smem, size = 0x4, offset = 0x4, fixed_abs, tag = 'smem constant byte address 0x4 - core index']
  #allocation1 [shape = 'u32[144,128]{1,0:T(1,128)}', space=vmem, size = 0x12000, scoped, tag = 'internal scratch']
  %s0 = inlined_call_operand.vmem [shape: f32[2,32], index: 0, kind: input, shape index: {}]
  %s1 = inlined_call_operand.hbm [shape: bf16[6,32,32], index: 1, kind: input, shape index: {}]
  %s2 = inlined_call_operand.vmem [shape: f32[6,1,32], index: 2, kind: input, shape index: {}]
  %s3 = inlined_call_operand.hbm [shape: f32[2,32], index: 3, kind: output, shape index: {}]
  %s4 = sld [smem:[#allocation0]]
  $region26: #{old_embed_block.1} parent=0
    _
  %s6 = ssub.s32 1, %s4
  %s7 = scalar_select 0, %s6, %s4
  $region1: #{old_embed_block.1} parent=0
    #allocation2 [shape = 'u8[49152]{0}', space=vmem, size = 0xc000, scoped, tag = 'input window, operand 1, single buffered']
    #allocation3 [shape = 's32[1]{0}', space=sflag, size = 0x4, scoped, tag = 'scoped memory for old_embed_block.1']
    #allocation4 [shape = 's32[1]{0}', space=sflag, size = 0x4, scoped, tag = 'scoped memory for old_embed_block.1']
    #allocation5 [shape = 'u8[1024]{0}', space=vmem, size = 0x400, scoped, tag = 'output window, operand 0, single buffered']
    %8 = vsyncpa [#allocation3], 0
    %9 = vsyncpa [#allocation4], 0
    // Predicated region
    $region2: #{old_embed_block.1} parent=1 // pred_check
      _
    $region3: #{old_embed_block.1} parent=1 // pred_check_branch
      %11 = sbr.rel (0) target = $region5
    $region4: #{old_embed_block.1} parent=1 // pred_region
      _
    $region5: #{old_embed_block.1} parent=1 // pred_fallthru
      _
    // Predicated region
    $region6: #{old_embed_block.1} parent=1 // pred_check
      _
    $region7: #{old_embed_block.1} parent=1 // pred_check_branch
      %13 = sbr.rel (0) target = $region9
    $region8: #{old_embed_block.1} parent=1 // pred_region
      %s15 = ssub.s32 1536, 1536
      %16 = vsyncadd [#allocation3], %s15
      %s17 = sshll.u32 [#allocation2], 4
      %s18 = int_to_ptr.vmem [resolvable:$true] %s17
      %23 = dma.hbm_to_vmem [thread:$0]  %s1, 1536, %s18, [#allocation3], 64, 64, 4
    $region9: #{old_embed_block.1} parent=1 // pred_fallthru
      _
    // Predicated region
    $region10: #{old_embed_block.1} parent=1 // pred_check
      _
    $region11: #{old_embed_block.1} parent=1 // pred_check_branch
      %25 = sbr.rel (0) target = $region13
    $region12: #{old_embed_block.1} parent=1 // pred_region
      _
    $region13: #{old_embed_block.1} parent=1 // pred_fallthru
      _
    // Predicated region
    $region14: #{old_embed_block.1} parent=1 // pred_check
      _
    $region15: #{old_embed_block.1} parent=1 // pred_check_branch
      %27 = sbr.rel (0) target = $region17
    $region16: #{old_embed_block.1} parent=1 // pred_region
      %28 = dma.done [#allocation3], 1536
    $region17: #{old_embed_block.1} parent=1 // pred_fallthru
      _
    %v30 = vld [vmem:[%s0] sm:$0x3]
    %v31 = vpack.c.bf16 %v30, %v30
    %v32 = vld [vmem:[#allocation2] sm:$0xf]
    %v33 = vld [vmem:[#allocation2 + $0x4] sm:$0xf]
    %v34 = vld [vmem:[#allocation2 + $0x8] sm:$0xf]
    %v35 = vld [vmem:[#allocation2 + $0xc] sm:$0xf]
    %v36 = vld [vmem:[%s2] sm:$0x1]
    %v38 = vlaneseq
    %v39 = vshrl.u32 %v38, 7
    %v40 = vsub.s32 0, %v39
    %v41 = vrot.slane %v36, %v40
    %v47 = vunpack.c.l.b16 %v32
    %v48 = vunpack.c.l.b16 %v33
    %v49 = vunpack.c.l.b16 %v34
    %v50 = vunpack.c.l.b16 %v35
    %v51 = vpack.c.b16 %v48, %v47
    %v52 = vpack.c.b16 %v50, %v49
    %vm55 = vcmask 261120
    %v57 = vsel %vm55, %v31, 0
    %59 = vmatprep.subr.bf16.mxu0 0
    %60 = vmatpush1.bf16.msra.mxu0 %v51
    %61 = vmatprep.subr.bf16.mxu0 0
    %62 = vmatpush1.bf16.msra.mxu0 %v52
    %63 = vmatprep.subr.bf16.mxu0 0
    %64 = vmatpush1.bf16.msra.mxu0 0
    %65 = vmatprep.subr.bf16.mxu0 0
    %66 = vmatpush1.bf16.msra.mxu0 0
    %67 = vmatprep.subr.bf16.mxu0 0
    %68 = vmatpush1.bf16.msra.mxu0 0
    %69 = vmatprep.subr.bf16.mxu0 0
    %70 = vmatpush1.bf16.msra.mxu0 0
    %71 = vmatprep.subr.bf16.mxu0 0
    %72 = vmatpush1.bf16.msra.mxu0 0
    %73 = vmatprep.subr.bf16.mxu0 0
    %74 = vmatpush1.bf16.msra.mxu0 0
    %75 = vmatprep.subr.bf16.mxu0 0
    %76 = vmatpush1.bf16.msra.mxu0 0
    %77 = vmatprep.subr.bf16.mxu0 0
    %78 = vmatpush1.bf16.msra.mxu0 0
    %79 = vmatprep.subr.bf16.mxu0 0
    %80 = vmatpush1.bf16.msra.mxu0 0
    %81 = vmatprep.subr.bf16.mxu0 0
    %82 = vmatpush1.bf16.msra.mxu0 0
    %83 = vmatprep.subr.bf16.mxu0 0
    %84 = vmatpush1.bf16.msra.mxu0 0
    %85 = vmatprep.subr.bf16.mxu0 0
    %86 = vmatpush1.bf16.msra.mxu0 0
    %87 = vmatprep.subr.bf16.mxu0 0
    %88 = vmatpush1.bf16.msra.mxu0 0
    %89 = vmatprep.subr.bf16.mxu0 0
    %90 = vmatpush1.bf16.msra.mxu0 0
    %91 = vmatprep.mubr.bf16.mxu0 0
    %92 = vmatmul.mubr.bf16.gmra.mrb[0].mxu0 %v57
    %v93 = vpop.f32.mrb[0].mxu0
    %v94 = vadd.f32 %v41, %v93
    %v95 = vpop.f32.mrb[0].mxu0
    %v96 = vpop.f32.mrb[0].mxu0
    %v97 = vpop.f32.mrb[0].mxu0
    %98 = vdwg.mxu0
    %v99 = vmul.f32 %v94, 0.01
    %v100 = vmax.f32 %v94, %v99
    %v101 = vpack.c.bf16 %v100, %v100
    %s102 = scalar_lea.vmem [#allocation2], 16
    %v103 = vld [vmem:[%s102] sm:$0xf]
    %v104 = vld [vmem:[%s102 + $0x4] sm:$0xf]
    %v105 = vld [vmem:[%s102 + $0x8] sm:$0xf]
    %v106 = vld [vmem:[%s102 + $0xc] sm:$0xf]
    %s107 = scalar_lea.vmem %s2, 1
    %v108 = vld [vmem:[%s107] sm:$0x1]
    %v110 = vlaneseq
    %v111 = vshrl.u32 %v110, 7
    %v112 = vsub.s32 0, %v111
    %v113 = vrot.slane %v108, %v112
    %v119 = vunpack.c.l.b16 %v103
    %v120 = vunpack.c.l.b16 %v104
    %v121 = vunpack.c.l.b16 %v105
    %v122 = vunpack.c.l.b16 %v106
    %v123 = vpack.c.b16 %v120, %v119
    %v124 = vpack.c.b16 %v122, %v121
    %v128 = vsel %vm55, %v101, 0
    %130 = vmatprep.subr.bf16.mxu0 0
    %131 = vmatpush1.bf16.msra.mxu0 %v123
    %132 = vmatprep.subr.bf16.mxu0 0
    %133 = vmatpush1.bf16.msra.mxu0 %v124
    %134 = vmatprep.subr.bf16.mxu0 0
    %135 = vmatpush1.bf16.msra.mxu0 0
    %136 = vmatprep.subr.bf16.mxu0 0
    %137 = vmatpush1.bf16.msra.mxu0 0
    %138 = vmatprep.subr.bf16.mxu0 0
    %139 = vmatpush1.bf16.msra.mxu0 0
    %140 = vmatprep.subr.bf16.mxu0 0
    %141 = vmatpush1.bf16.msra.mxu0 0
    %142 = vmatprep.subr.bf16.mxu0 0
    %143 = vmatpush1.bf16.msra.mxu0 0
    %144 = vmatprep.subr.bf16.mxu0 0
    %145 = vmatpush1.bf16.msra.mxu0 0
    %146 = vmatprep.subr.bf16.mxu0 0
    %147 = vmatpush1.bf16.msra.mxu0 0
    %148 = vmatprep.subr.bf16.mxu0 0
    %149 = vmatpush1.bf16.msra.mxu0 0
    %150 = vmatprep.subr.bf16.mxu0 0
    %151 = vmatpush1.bf16.msra.mxu0 0
    %152 = vmatprep.subr.bf16.mxu0 0
    %153 = vmatpush1.bf16.msra.mxu0 0
    %154 = vmatprep.subr.bf16.mxu0 0
    %155 = vmatpush1.bf16.msra.mxu0 0
    %156 = vmatprep.subr.bf16.mxu0 0
    %157 = vmatpush1.bf16.msra.mxu0 0
    %158 = vmatprep.subr.bf16.mxu0 0
    %159 = vmatpush1.bf16.msra.mxu0 0
    %160 = vmatprep.subr.bf16.mxu0 0
    %161 = vmatpush1.bf16.msra.mxu0 0
    %162 = vmatprep.mubr.bf16.mxu0 0
    %163 = vmatmul.mubr.bf16.gmra.mrb[0].mxu0 %v128
    %v164 = vpop.f32.mrb[0].mxu0
    %v165 = vadd.f32 %v113, %v164
    %v166 = vpop.f32.mrb[0].mxu0
    %v167 = vpop.f32.mrb[0].mxu0
    %v168 = vpop.f32.mrb[0].mxu0
    %169 = vdwg.mxu0
    %v170 = vmul.f32 %v165, 0.01
    %v171 = vmax.f32 %v165, %v170
    %v172 = vpack.c.bf16 %v171, %v171
    %s173 = scalar_lea.vmem [#allocation2], 32
    %v174 = vld [vmem:[%s173] sm:$0xf]
    %v175 = vld [vmem:[%s173 + $0x4] sm:$0xf]
    %v176 = vld [vmem:[%s173 + $0x8] sm:$0xf]
    %v177 = vld [vmem:[%s173 + $0xc] sm:$0xf]
    %s178 = scalar_lea.vmem %s2, 2
    %v179 = vld [vmem:[%s178] sm:$0x1]
    %v181 = vlaneseq
    %v182 = vshrl.u32 %v181, 7
    %v183 = vsub.s32 0, %v182
    %v184 = vrot.slane %v179, %v183
    %v190 = vunpack.c.l.b16 %v174
    %v191 = vunpack.c.l.b16 %v175
    %v192 = vunpack.c.l.b16 %v176
    %v193 = vunpack.c.l.b16 %v177
    %v194 = vpack.c.b16 %v191, %v190
    %v195 = vpack.c.b16 %v193, %v192
    %v199 = vsel %vm55, %v172, 0
    %201 = vmatprep.subr.bf16.mxu0 0
    %202 = vmatpush1.bf16.msra.mxu0 %v194
    %203 = vmatprep.subr.bf16.mxu0 0
    %204 = vmatpush1.bf16.msra.mxu0 %v195
    %205 = vmatprep.subr.bf16.mxu0 0
    %206 = vmatpush1.bf16.msra.mxu0 0
    %207 = vmatprep.subr.bf16.mxu0 0
    %208 = vmatpush1.bf16.msra.mxu0 0
    %209 = vmatprep.subr.bf16.mxu0 0
    %210 = vmatpush1.bf16.msra.mxu0 0
    %211 = vmatprep.subr.bf16.mxu0 0
    %212 = vmatpush1.bf16.msra.mxu0 0
    %213 = vmatprep.subr.bf16.mxu0 0
    %214 = vmatpush1.bf16.msra.mxu0 0
    %215 = vmatprep.subr.bf16.mxu0 0
    %216 = vmatpush1.bf16.msra.mxu0 0
    %217 = vmatprep.subr.bf16.mxu0 0
    %218 = vmatpush1.bf16.msra.mxu0 0
    %219 = vmatprep.subr.bf16.mxu0 0
    %220 = vmatpush1.bf16.msra.mxu0 0
    %221 = vmatprep.subr.bf16.mxu0 0
    %222 = vmatpush1.bf16.msra.mxu0 0
    %223 = vmatprep.subr.bf16.mxu0 0
    %224 = vmatpush1.bf16.msra.mxu0 0
    %225 = vmatprep.subr.bf16.mxu0 0
    %226 = vmatpush1.bf16.msra.mxu0 0
    %227 = vmatprep.subr.bf16.mxu0 0
    %228 = vmatpush1.bf16.msra.mxu0 0
    %229 = vmatprep.subr.bf16.mxu0 0
    %230 = vmatpush1.bf16.msra.mxu0 0
    %231 = vmatprep.subr.bf16.mxu0 0
    %232 = vmatpush1.bf16.msra.mxu0 0
    %233 = vmatprep.mubr.bf16.mxu0 0
    %234 = vmatmul.mubr.bf16.gmra.mrb[0].mxu0 %v199
    %v235 = vpop.f32.mrb[0].mxu0
    %v236 = vadd.f32 %v184, %v235
    %v237 = vpop.f32.mrb[0].mxu0
    %v238 = vpop.f32.mrb[0].mxu0
    %v239 = vpop.f32.mrb[0].mxu0
    %240 = vdwg.mxu0
    %v241 = vmul.f32 %v236, 0.01
    %v242 = vmax.f32 %v236, %v241
    %v243 = vpack.c.bf16 %v242, %v242
    %s244 = scalar_lea.vmem [#allocation2], 48
    %v245 = vld [vmem:[%s244] sm:$0xf]
    %v246 = vld [vmem:[%s244 + $0x4] sm:$0xf]
    %v247 = vld [vmem:[%s244 + $0x8] sm:$0xf]
    %v248 = vld [vmem:[%s244 + $0xc] sm:$0xf]
    %s249 = scalar_lea.vmem %s2, 3
    %v250 = vld [vmem:[%s249] sm:$0x1]
    %v252 = vlaneseq
    %v253 = vshrl.u32 %v252, 7
    %v254 = vsub.s32 0, %v253
    %v255 = vrot.slane %v250, %v254
    %v261 = vunpack.c.l.b16 %v245
    %v262 = vunpack.c.l.b16 %v246
    %v263 = vunpack.c.l.b16 %v247
    %v264 = vunpack.c.l.b16 %v248
    %v265 = vpack.c.b16 %v262, %v261
    %v266 = vpack.c.b16 %v264, %v263
    %v270 = vsel %vm55, %v243, 0
    %272 = vmatprep.subr.bf16.mxu0 0
    %273 = vmatpush1.bf16.msra.mxu0 %v265
    %274 = vmatprep.subr.bf16.mxu0 0
    %275 = vmatpush1.bf16.msra.mxu0 %v266
    %276 = vmatprep.subr.bf16.mxu0 0
    %277 = vmatpush1.bf16.msra.mxu0 0
    %278 = vmatprep.subr.bf16.mxu0 0
    %279 = vmatpush1.bf16.msra.mxu0 0
    %280 = vmatprep.subr.bf16.mxu0 0
    %281 = vmatpush1.bf16.msra.mxu0 0
    %282 = vmatprep.subr.bf16.mxu0 0
    %283 = vmatpush1.bf16.msra.mxu0 0
    %284 = vmatprep.subr.bf16.mxu0 0
    %285 = vmatpush1.bf16.msra.mxu0 0
    %286 = vmatprep.subr.bf16.mxu0 0
    %287 = vmatpush1.bf16.msra.mxu0 0
    %288 = vmatprep.subr.bf16.mxu0 0
    %289 = vmatpush1.bf16.msra.mxu0 0
    %290 = vmatprep.subr.bf16.mxu0 0
    %291 = vmatpush1.bf16.msra.mxu0 0
    %292 = vmatprep.subr.bf16.mxu0 0
    %293 = vmatpush1.bf16.msra.mxu0 0
    %294 = vmatprep.subr.bf16.mxu0 0
    %295 = vmatpush1.bf16.msra.mxu0 0
    %296 = vmatprep.subr.bf16.mxu0 0
    %297 = vmatpush1.bf16.msra.mxu0 0
    %298 = vmatprep.subr.bf16.mxu0 0
    %299 = vmatpush1.bf16.msra.mxu0 0
    %300 = vmatprep.subr.bf16.mxu0 0
    %301 = vmatpush1.bf16.msra.mxu0 0
    %302 = vmatprep.subr.bf16.mxu0 0
    %303 = vmatpush1.bf16.msra.mxu0 0
    %304 = vmatprep.mubr.bf16.mxu0 0
    %305 = vmatmul.mubr.bf16.gmra.mrb[0].mxu0 %v270
    %v306 = vpop.f32.mrb[0].mxu0
    %v307 = vadd.f32 %v255, %v306
    %v308 = vpop.f32.mrb[0].mxu0
    %v309 = vpop.f32.mrb[0].mxu0
    %v310 = vpop.f32.mrb[0].mxu0
    %311 = vdwg.mxu0
    %v312 = vmul.f32 %v307, 0.01
    %v313 = vmax.f32 %v307, %v312
    %v314 = vpack.c.bf16 %v313, %v313
    %s315 = scalar_lea.vmem [#allocation2], 64
    %v316 = vld [vmem:[%s315] sm:$0xf]
    %v317 = vld [vmem:[%s315 + $0x4] sm:$0xf]
    %v318 = vld [vmem:[%s315 + $0x8] sm:$0xf]
    %v319 = vld [vmem:[%s315 + $0xc] sm:$0xf]
    %s320 = scalar_lea.vmem %s2, 4
    %v321 = vld [vmem:[%s320] sm:$0x1]
    %v323 = vlaneseq
    %v324 = vshrl.u32 %v323, 7
    %v325 = vsub.s32 0, %v324
    %v326 = vrot.slane %v321, %v325
    %v332 = vunpack.c.l.b16 %v316
    %v333 = vunpack.c.l.b16 %v317
    %v334 = vunpack.c.l.b16 %v318
    %v335 = vunpack.c.l.b16 %v319
    %v336 = vpack.c.b16 %v333, %v332
    %v337 = vpack.c.b16 %v335, %v334
    %v341 = vsel %vm55, %v314, 0
    %343 = vmatprep.subr.bf16.mxu0 0
    %344 = vmatpush1.bf16.msra.mxu0 %v336
    %345 = vmatprep.subr.bf16.mxu0 0
    %346 = vmatpush1.bf16.msra.mxu0 %v337
    %347 = vmatprep.subr.bf16.mxu0 0
    %348 = vmatpush1.bf16.msra.mxu0 0
    %349 = vmatprep.subr.bf16.mxu0 0
    %350 = vmatpush1.bf16.msra.mxu0 0
    %351 = vmatprep.subr.bf16.mxu0 0
    %352 = vmatpush1.bf16.msra.mxu0 0
    %353 = vmatprep.subr.bf16.mxu0 0
    %354 = vmatpush1.bf16.msra.mxu0 0
    %355 = vmatprep.subr.bf16.mxu0 0
    %356 = vmatpush1.bf16.msra.mxu0 0
    %357 = vmatprep.subr.bf16.mxu0 0
    %358 = vmatpush1.bf16.msra.mxu0 0
    %359 = vmatprep.subr.bf16.mxu0 0
    %360 = vmatpush1.bf16.msra.mxu0 0
    %361 = vmatprep.subr.bf16.mxu0 0
    %362 = vmatpush1.bf16.msra.mxu0 0
    %363 = vmatprep.subr.bf16.mxu0 0
    %364 = vmatpush1.bf16.msra.mxu0 0
    %365 = vmatprep.subr.bf16.mxu0 0
    %366 = vmatpush1.bf16.msra.mxu0 0
    %367 = vmatprep.subr.bf16.mxu0 0
    %368 = vmatpush1.bf16.msra.mxu0 0
    %369 = vmatprep.subr.bf16.mxu0 0
    %370 = vmatpush1.bf16.msra.mxu0 0
    %371 = vmatprep.subr.bf16.mxu0 0
    %372 = vmatpush1.bf16.msra.mxu0 0
    %373 = vmatprep.subr.bf16.mxu0 0
    %374 = vmatpush1.bf16.msra.mxu0 0
    %375 = vmatprep.mubr.bf16.mxu0 0
    %376 = vmatmul.mubr.bf16.gmra.mrb[0].mxu0 %v341
    %v377 = vpop.f32.mrb[0].mxu0
    %v378 = vadd.f32 %v326, %v377
    %v379 = vpop.f32.mrb[0].mxu0
    %v380 = vpop.f32.mrb[0].mxu0
    %v381 = vpop.f32.mrb[0].mxu0
    %382 = vdwg.mxu0
    %v383 = vmul.f32 %v378, 0.01
    %v384 = vmax.f32 %v378, %v383
    %v385 = vpack.c.bf16 %v384, %v384
    %s386 = scalar_lea.vmem [#allocation2], 80
    %v387 = vld [vmem:[%s386] sm:$0xf]
    %v388 = vld [vmem:[%s386 + $0x4] sm:$0xf]
    %v389 = vld [vmem:[%s386 + $0x8] sm:$0xf]
    %v390 = vld [vmem:[%s386 + $0xc] sm:$0xf]
    %s391 = scalar_lea.vmem %s2, 5
    %v392 = vld [vmem:[%s391] sm:$0x1]
    %v394 = vlaneseq
    %v395 = vshrl.u32 %v394, 7
    %v396 = vsub.s32 0, %v395
    %v397 = vrot.slane %v392, %v396
    %v403 = vunpack.c.l.b16 %v387
    %v404 = vunpack.c.l.b16 %v388
    %v405 = vunpack.c.l.b16 %v389
    %v406 = vunpack.c.l.b16 %v390
    %v407 = vpack.c.b16 %v404, %v403
    %v408 = vpack.c.b16 %v406, %v405
    %v412 = vsel %vm55, %v385, 0
    %414 = vmatprep.subr.bf16.mxu0 0
    %415 = vmatpush1.bf16.msra.mxu0 %v407
    %416 = vmatprep.subr.bf16.mxu0 0
    %417 = vmatpush1.bf16.msra.mxu0 %v408
    %418 = vmatprep.subr.bf16.mxu0 0
    %419 = vmatpush1.bf16.msra.mxu0 0
    %420 = vmatprep.subr.bf16.mxu0 0
    %421 = vmatpush1.bf16.msra.mxu0 0
    %422 = vmatprep.subr.bf16.mxu0 0
    %423 = vmatpush1.bf16.msra.mxu0 0
    %424 = vmatprep.subr.bf16.mxu0 0
    %425 = vmatpush1.bf16.msra.mxu0 0
    %426 = vmatprep.subr.bf16.mxu0 0
    %427 = vmatpush1.bf16.msra.mxu0 0
    %428 = vmatprep.subr.bf16.mxu0 0
    %429 = vmatpush1.bf16.msra.mxu0 0
    %430 = vmatprep.subr.bf16.mxu0 0
    %431 = vmatpush1.bf16.msra.mxu0 0
    %432 = vmatprep.subr.bf16.mxu0 0
    %433 = vmatpush1.bf16.msra.mxu0 0
    %434 = vmatprep.subr.bf16.mxu0 0
    %435 = vmatpush1.bf16.msra.mxu0 0
    %436 = vmatprep.subr.bf16.mxu0 0
    %437 = vmatpush1.bf16.msra.mxu0 0
    %438 = vmatprep.subr.bf16.mxu0 0
    %439 = vmatpush1.bf16.msra.mxu0 0
    %440 = vmatprep.subr.bf16.mxu0 0
    %441 = vmatpush1.bf16.msra.mxu0 0
    %442 = vmatprep.subr.bf16.mxu0 0
    %443 = vmatpush1.bf16.msra.mxu0 0
    %444 = vmatprep.subr.bf16.mxu0 0
    %445 = vmatpush1.bf16.msra.mxu0 0
    %446 = vmatprep.mubr.bf16.mxu0 0
    %447 = vmatmul.mubr.bf16.gmra.mrb[0].mxu0 %v412
    %v448 = vpop.f32.mrb[0].mxu0
    %v449 = vadd.f32 %v397, %v448
    %v450 = vpop.f32.mrb[0].mxu0
    %v451 = vpop.f32.mrb[0].mxu0
    %v452 = vpop.f32.mrb[0].mxu0
    %453 = vdwg.mxu0
    %v454 = vmul.f32 %v449, 0.01
    %v455 = vmax.f32 %v449, %v454
    %vm456 = vcmask 254976
    %457 = vst.msk [vmem:[#allocation5] sm:$0x3] %vm456, %v455
    // Predicated region
    $region18: #{old_embed_block.1} parent=1 // pred_check
      _
    $region19: #{old_embed_block.1} parent=1 // pred_check_branch
      %459 = sbr.rel (0) target = $region21
    $region20: #{old_embed_block.1} parent=1 // pred_region
      %s461 = ssub.s32 32, 32
      %462 = vsyncadd [#allocation4], %s461
      %s464 = sshll.u32 [#allocation5], 4
      %s465 = int_to_ptr.vmem [resolvable:$true] %s464
      %467 = dma.vmem_to_hbm [thread:$0]  %s465, 32, %s3, [#allocation4]
    $region21: #{old_embed_block.1} parent=1 // pred_fallthru
      _
    // Predicated region
    $region22: #{old_embed_block.1} parent=1 // pred_check
      _
    $region23: #{old_embed_block.1} parent=1 // pred_check_branch
      %469 = sbr.rel (0) target = $region25
    $region24: #{old_embed_block.1} parent=1 // pred_region
      %470 = dma.done [#allocation4], 32
    $region25: #{old_embed_block.1} parent=1 // pred_fallthru
      _
    %471 = vsyncpa [#allocation3], 1
    %472 = vsyncpa [#allocation4], 1

</llo_original>
